<compile_context>
chip_gen: v7x
topology: tpu7x:2x2x1
jax: 0.10.0
libtpu: 0.0.40
codegen_flags: <defaults>
</compile_context>

<pallas_src>
import math
import re

import jax
import jax.numpy as jnp
from jax.experimental import pallas as pl
from jax.experimental.pallas import tpu as pltpu


# ----------------------------------------------------------------------------
# Tokenizer (ported verbatim; only used to build a small deterministic vocab)
# ----------------------------------------------------------------------------
class APECLAsmTokenizer:
    def __init__(self):
        self.special_tokens = {'<MEM>': 1, '<STR>': 2, '<ADDR>': 3}
        self.token_to_id = {'[PAD]': 0}
        self.id_to_token = {0: '[PAD]'}
        self.current_id = len(self.token_to_id)

    def add_token(self, token):
        if token not in self.token_to_id:
            self.token_to_id[token] = self.current_id
            self.id_to_token[self.current_id] = token
            self.current_id += 1

    def tokenize(self, asm_code):
        tokens = re.findall('\\w+|[^\\w\\s]', asm_code)
        processed = []
        for token in tokens:
            if re.match('0x[0-9a-fA-F]{4,}', token):
                processed.append('<ADDR>')
            elif re.match('0x[0-9a-fA-F]{1,4}', token):
                processed.append(token)
            elif re.match('\\[.*\\]', token):
                processed.append('<MEM>')
            elif re.match('\\".*\\"', token):
                processed.append('<STR>')
            else:
                processed.append(token)
        ids = []
        for token in processed:
            if token not in self.token_to_id:
                self.add_token(token)
            ids.append(self.token_to_id[token])
        return ids


# ----------------------------------------------------------------------------
# Model configuration (fixed by the reference module)
# ----------------------------------------------------------------------------
HIDDEN = 512
N_LAYERS = 8
N_HEADS = 8
HEAD_DIM = HIDDEN // N_HEADS            # 64
PAIR_DIM = 2 * HEAD_DIM                 # 128  (lane-aligned head pair)
N_PAIRS = N_HEADS // 2                  # 4
INTERMEDIATE = 1024
MAX_POS = 512
TYPE_VOCAB = 2000
OUT_DIM = 768
LN_EPS = 1e-12
MASK_NEG = -1e9                         # large finite (avoids -inf -> NaN rows)
F32 = jnp.float32
BF16 = jnp.bfloat16
VMEM_LIMIT = 32 * 1024 * 1024           # safe on v5e/v6e/v7x, above v5e default


# ----------------------------------------------------------------------------
# Tiling helpers
# ----------------------------------------------------------------------------
def _tile_sublane(dim, pref, min_steps=1):
    """Largest multiple-of-8 tile <= pref dividing dim; optionally prefer a
    tile that yields >= min_steps grid steps (v7x dual-TC).  Falls back to the
    full dim (always legal for a BlockSpec)."""
    cap = min(pref, dim)
    if min_steps > 1 and dim >= 8 * min_steps:
        cap = min(cap, dim // min_steps)
    t = cap - cap % 8
    while t >= 8:
        if dim % t == 0:
            return t
        t -= 8
    return dim


def _tile_lane(dim, pref):
    """Largest multiple-of-128 tile <= pref that divides dim, else full dim."""
    t = min(pref, dim)
    t -= t % 128
    while t >= 128:
        if dim % t == 0:
            return t
        t -= 128
    return dim


def _gelu_exact(x):
    # BERT default hidden_act = "gelu" (erf formulation), f32 math on the VPU.
    return x * 0.5 * (1.0 + jax.lax.erf(x * 0.7071067811865476))


# ----------------------------------------------------------------------------
# Pallas kernels
# ----------------------------------------------------------------------------
def linear(x, w, b, activation=None, tm=512, tn=256):
    """y = act(x @ w + b).  x:(M,K) f32, w:(K,N) f32 -> bf16 operands on MXU.

    2-D grid over (M tiles, N tiles); both axes 'parallel'."""
    M, K = x.shape
    K2, N = w.shape
    assert K == K2
    tm = _tile_sublane(M, tm)
    tn = _tile_lane(N, tn)
    w_bf = w.astype(BF16)

    def kernel(x_ref, w_ref, b_ref, o_ref):
        acc = jnp.dot(x_ref[...].astype(BF16), w_ref[...],
                      preferred_element_type=jnp.float32)
        acc = acc + b_ref[...]
        if activation == "gelu":
            acc = _gelu_exact(acc)
        o_ref[...] = acc

    return pl.pallas_call(
        kernel,
        out_shape=jax.ShapeDtypeStruct((M, N), F32),
        grid_spec=pltpu.PrefetchScalarGridSpec(
            num_scalar_prefetch=0,
            grid=(M // tm, N // tn),
            in_specs=[
                pl.BlockSpec((tm, K), lambda i, j: (i, 0)),
                pl.BlockSpec((K, tn), lambda i, j: (0, j)),
                pl.BlockSpec((1, tn), lambda i, j: (0, j)),
            ],
            out_specs=pl.BlockSpec((tm, tn), lambda i, j: (i, j)),
        ),
        compiler_params=pltpu.CompilerParams(
            dimension_semantics=("parallel", "parallel"),
            vmem_limit_bytes=VMEM_LIMIT),
    )(x, w_bf, b.reshape(1, N))


def linear_add_ln(x, w, b, residual, gamma, beta, tm=512):
    """LayerNorm((x @ w + b) + residual), eps=1e-12.

    Matmul (bf16 operands, f32 accumulate) with bias/residual/LN fused in the
    epilogue (f32).  Grid over M only (LN needs the full row); the (K, N)
    bf16 weight stays resident (constant index_map)."""
    M, K = x.shape
    K2, N = w.shape
    assert K == K2 and residual.shape == (M, N)
    tm = _tile_sublane(M, tm, min_steps=2)
    w_bf = w.astype(BF16)

    def kernel(x_ref, w_ref, b_ref, r_ref, g_ref, be_ref, o_ref):
        acc = jnp.dot(x_ref[...].astype(BF16), w_ref[...],
                      preferred_element_type=jnp.float32)
        acc = acc + b_ref[...] + r_ref[...]
        mean = jnp.mean(acc, axis=-1, keepdims=True)
        var = jnp.mean(jnp.square(acc - mean), axis=-1, keepdims=True)
        o_ref[...] = ((acc - mean) * jax.lax.rsqrt(var + LN_EPS)
                      * g_ref[...] + be_ref[...])

    return pl.pallas_call(
        kernel,
        out_shape=jax.ShapeDtypeStruct((M, N), F32),
        grid_spec=pltpu.PrefetchScalarGridSpec(
            num_scalar_prefetch=0,
            grid=(M // tm,),
            in_specs=[
                pl.BlockSpec((tm, K), lambda i: (i, 0)),
                pl.BlockSpec((K, N), lambda i: (0, 0)),
                pl.BlockSpec((1, N), lambda i: (0, 0)),
                pl.BlockSpec((tm, N), lambda i: (i, 0)),
                pl.BlockSpec((1, N), lambda i: (0, 0)),
                pl.BlockSpec((1, N), lambda i: (0, 0)),
            ],
            out_specs=pl.BlockSpec((tm, N), lambda i: (i, 0)),
        ),
        compiler_params=pltpu.CompilerParams(
            dimension_semantics=("parallel",),
            vmem_limit_bytes=VMEM_LIMIT),
    )(x, w_bf, b.reshape(1, N), residual, gamma.reshape(1, N), beta.reshape(1, N))


def layernorm(x, gamma, beta, tm=512):
    """LayerNorm(x) over last dim (no residual; embedding LN).  f32."""
    M, H = x.shape
    tm = _tile_sublane(M, tm, min_steps=2)

    def kernel(x_ref, g_ref, b_ref, o_ref):
        xx = x_ref[...]
        mean = jnp.mean(xx, axis=-1, keepdims=True)
        var = jnp.mean(jnp.square(xx - mean), axis=-1, keepdims=True)
        o_ref[...] = (xx - mean) * jax.lax.rsqrt(var + LN_EPS) * g_ref[...] + b_ref[...]

    return pl.pallas_call(
        kernel,
        out_shape=jax.ShapeDtypeStruct((M, H), F32),
        grid_spec=pltpu.PrefetchScalarGridSpec(
            num_scalar_prefetch=0,
            grid=(M // tm,),
            in_specs=[
                pl.BlockSpec((tm, H), lambda i: (i, 0)),
                pl.BlockSpec((1, H), lambda i: (0, 0)),
                pl.BlockSpec((1, H), lambda i: (0, 0)),
            ],
            out_specs=pl.BlockSpec((tm, H), lambda i: (i, 0)),
        ),
        compiler_params=pltpu.CompilerParams(
            dimension_semantics=("parallel",),
            vmem_limit_bytes=VMEM_LIMIT),
    )(x, gamma.reshape(1, H), beta.reshape(1, H))


def qkv_attention(x, qkv_w, qkv_b, add_mask):
    """Fused QKV projection + multi-head self-attention.

    x:        (B, S, HIDDEN) f32 hidden states.
    qkv_w:    (HIDDEN, 3*HIDDEN) f32, [Q | K | V] columns (cast to bf16 here).
    qkv_b:    (3*HIDDEN,) f32.
    add_mask: (B, 1, S) additive mask (f32, finite large-negative).

    Grid over batches; qkv_w stays VMEM-resident (constant index_map).  Heads
    are processed in 128-lane-aligned pairs; Q/K/V per pair are computed by
    slicing 128-wide column blocks of the resident weight, and each (S, 128)
    context slab is stored lane-dense straight into the output block."""
    B, S, H = x.shape
    assert H == HIDDEN
    scale = 1.0 / math.sqrt(HEAD_DIM)
    w_bf = qkv_w.astype(BF16)

    def kernel(x_ref, w_ref, b_ref, m_ref, o_ref):
        xb = x_ref[0].astype(BF16)                            # (S, 512) bf16
        mask = m_ref[0]                                       # (1, S) f32
        for p in range(N_PAIRS):                              # 4 head pairs
            lo = p * PAIR_DIM                                 # 0,128,256,384
            qp = (jnp.dot(xb, w_ref[:, lo:lo + PAIR_DIM],
                          preferred_element_type=jnp.float32)
                  + b_ref[:, lo:lo + PAIR_DIM])               # (S, 128) f32
            kp = (jnp.dot(xb, w_ref[:, HIDDEN + lo:HIDDEN + lo + PAIR_DIM],
                          preferred_element_type=jnp.float32)
                  + b_ref[:, HIDDEN + lo:HIDDEN + lo + PAIR_DIM])
            vp = (jnp.dot(xb, w_ref[:, 2 * HIDDEN + lo:2 * HIDDEN + lo + PAIR_DIM],
                          preferred_element_type=jnp.float32)
                  + b_ref[:, 2 * HIDDEN + lo:2 * HIDDEN + lo + PAIR_DIM])
            ctx_pair = []
            for hh in range(2):                               # 2 heads / pair
                c0 = hh * HEAD_DIM
                q_h = qp[:, c0:c0 + HEAD_DIM].astype(BF16)
                k_h = kp[:, c0:c0 + HEAD_DIM].astype(BF16)
                v_h = vp[:, c0:c0 + HEAD_DIM].astype(BF16)
                # QK^T without an in-kernel transpose: contract dim -1 of both.
                scores = jax.lax.dot_general(
                    q_h, k_h, (((1,), (1,)), ((), ())),
                    preferred_element_type=jnp.float32) * scale
                scores = scores + mask
                smax = jnp.max(scores, axis=-1, keepdims=True)
                e = jnp.exp(scores - smax)
                probs = e * pl.reciprocal(jnp.sum(e, axis=-1, keepdims=True),
                                          approx=True)
                ctx_pair.append(jnp.dot(probs.astype(BF16), v_h,
                                        preferred_element_type=jnp.float32))
            # lane-dense, 128-aligned store of the pair's context slab
            o_ref[0, :, lo:lo + PAIR_DIM] = jnp.concatenate(ctx_pair, axis=-1)

    return pl.pallas_call(
        kernel,
        out_shape=jax.ShapeDtypeStruct((B, S, HIDDEN), F32),
        grid_spec=pltpu.PrefetchScalarGridSpec(
            num_scalar_prefetch=0,
            grid=(B,),
            in_specs=[
                pl.BlockSpec((1, S, HIDDEN), lambda b: (b, 0, 0)),
                pl.BlockSpec((HIDDEN, 3 * HIDDEN), lambda b: (0, 0)),
                pl.BlockSpec((1, 3 * HIDDEN), lambda b: (0, 0)),
                pl.BlockSpec((1, 1, S), lambda b: (b, 0, 0)),
            ],
            out_specs=pl.BlockSpec((1, S, HIDDEN), lambda b: (b, 0, 0)),
        ),
        compiler_params=pltpu.CompilerParams(
            dimension_semantics=("parallel",),
            vmem_limit_bytes=VMEM_LIMIT),
    )(x, w_bf, qkv_b.reshape(1, 3 * HIDDEN), add_mask)


def mean_pool_linear(x, w, b):
    """Fused: mean over seq dim then y = pooled @ w + b.

    x:(B, S, H) f32, w:(H, N) f32 (cast to bf16), b:(N,) -> (B, N) f32."""
    B, S, H = x.shape
    H2, N = w.shape
    assert H == H2
    w_bf = w.astype(BF16)
    inv_s = 1.0 / float(S)

    def kernel(x_ref, w_ref, b_ref, o_ref):
        pooled = jnp.sum(x_ref[0], axis=0, keepdims=True) * inv_s   # (1, H) f32
        o_ref[0] = (jnp.dot(pooled.astype(BF16), w_ref[...],
                            preferred_element_type=jnp.float32) + b_ref[...])

    out = pl.pallas_call(
        kernel,
        out_shape=jax.ShapeDtypeStruct((B, 1, N), F32),
        grid_spec=pltpu.PrefetchScalarGridSpec(
            num_scalar_prefetch=0,
            grid=(B,),
            in_specs=[
                pl.BlockSpec((1, S, H), lambda b: (b, 0, 0)),
                pl.BlockSpec((H, N), lambda b: (0, 0)),
                pl.BlockSpec((1, N), lambda b: (0, 0)),
            ],
            out_specs=pl.BlockSpec((1, 1, N), lambda b: (b, 0, 0)),
        ),
        compiler_params=pltpu.CompilerParams(
            dimension_semantics=("parallel",),
            vmem_limit_bytes=VMEM_LIMIT),
    )(x, w_bf, b.reshape(1, N))
    return out.reshape(B, N)


# ----------------------------------------------------------------------------
# Parameters (deterministic synthetic init; HF BERT uses N(0, 0.02)).
# Q/K/V weights are pre-concatenated into one (HIDDEN, 3*HIDDEN) matrix.
# ----------------------------------------------------------------------------
def init_params(key, vocab_size):
    keys = iter(jax.random.split(key, 128))

    def w(shape):
        return 0.02 * jax.random.normal(next(keys), shape, F32)

    def zeros(shape):
        return jnp.zeros(shape, F32)

    params = {
        "word_emb": w((vocab_size, HIDDEN)),
        "pos_emb": w((MAX_POS, HIDDEN)),
        "type_emb": w((TYPE_VOCAB, HIDDEN)),
        "emb_ln_g": jnp.ones((HIDDEN,), F32),
        "emb_ln_b": zeros((HIDDEN,)),
        "layers": [],
        "fc_out_w": w((HIDDEN, OUT_DIM)),
        "fc_out_b": zeros((OUT_DIM,)),
    }
    for _ in range(N_LAYERS):
        q_w, k_w, v_w = w((HIDDEN, HIDDEN)), w((HIDDEN, HIDDEN)), w((HIDDEN, HIDDEN))
        params["layers"].append({
            "qkv_w": jnp.concatenate([q_w, k_w, v_w], axis=1),   # (512, 1536)
            "qkv_b": zeros((3 * HIDDEN,)),
            "o_w": w((HIDDEN, HIDDEN)), "o_b": zeros((HIDDEN,)),
            "ln1_g": jnp.ones((HIDDEN,), F32), "ln1_b": zeros((HIDDEN,)),
            "i_w": w((HIDDEN, INTERMEDIATE)), "i_b": zeros((INTERMEDIATE,)),
            "d_w": w((INTERMEDIATE, HIDDEN)), "d_b": zeros((HIDDEN,)),
            "ln2_g": jnp.ones((HIDDEN,), F32), "ln2_b": zeros((HIDDEN,)),
        })
    return params


# ----------------------------------------------------------------------------
# Forward pass
# ----------------------------------------------------------------------------
def bert_layer(x, p, add_mask, B, S):
    # x: (B*S, HIDDEN)
    ctx = qkv_attention(x.reshape(B, S, HIDDEN), p["qkv_w"], p["qkv_b"], add_mask)
    ctx = ctx.reshape(B * S, HIDDEN)

    # attention output projection fused with residual-add + LayerNorm
    x = linear_add_ln(ctx, p["o_w"], p["o_b"], x, p["ln1_g"], p["ln1_b"])

    inter = linear(x, p["i_w"], p["i_b"], activation="gelu")   # (B*S, 1024)
    x = linear_add_ln(inter, p["d_w"], p["d_b"], x, p["ln2_g"], p["ln2_b"])
    return x


def apacl_forward(params, src):
    # mirrors ApaclModel.forward: squeeze -> BERT -> mean(dim=1) -> fc_out
    # NOTE: squeeze() with no axis matches the PyTorch reference.
    input_ids = jnp.squeeze(src["input_ids"])
    attention_mask = jnp.squeeze(src["attention_mask"])
    token_type_ids = jnp.squeeze(src["token_type_ids"])

    B, S = input_ids.shape

    # Embeddings (gather = glue in plain JAX) + LayerNorm (Pallas, no residual)
    pos_ids = jnp.arange(S, dtype=jnp.int32)
    emb = (params["word_emb"][input_ids]
           + params["pos_emb"][pos_ids][None, :, :]
           + params["type_emb"][token_type_ids])
    x = emb.reshape(B * S, HIDDEN).astype(F32)
    x = layernorm(x, params["emb_ln_g"], params["emb_ln_b"])

    # Additive attention mask.  HF uses (1-mask)*finfo.min; we use a large
    # finite constant so fully-masked rows cannot produce NaN.
    add_mask = ((1.0 - attention_mask.astype(F32)) * MASK_NEG).reshape(B, 1, S)

    for layer_params in params["layers"]:
        x = bert_layer(x, layer_params, add_mask, B, S)

    last_hidden = x.reshape(B, S, HIDDEN)
    out = mean_pool_linear(last_hidden, params["fc_out_w"], params["fc_out_b"])
    return out                                                   # (B, 768)


class ApaclModelPallas:
    def __init__(self, params):
        self.params = params

    def __call__(self, src):
        return apacl_forward(self.params, src)


# ----------------------------------------------------------------------------
# Main
# ----------------------------------------------------------------------------
if __name__ == "__main__":
    key = jax.random.PRNGKey(0)

    # Build a small deterministic vocabulary + example token ids.
    # TODO(synk): the reference tokenizer exposes no `vocab_size` attribute
    # (the PyTorch code would raise); we use the vocab built from these samples.
    tok = APECLAsmTokenizer()
    samples = ["mov eax , 0x10", "push dword [ ebp + 0x8 ]"]
    B, S = 2, 8
    ids_list, mask_list = [], []
    for code in samples:
        t = tok.tokenize(code)[:S]
        m = [1] * len(t) + [0] * (S - len(t))
        t = t + [0] * (S - len(t))
        ids_list.append(t)
        mask_list.append(m)
    vocab_size = max(tok.current_id, 8)

    # Inputs shaped (B, 1, S) to exercise the module's .squeeze() calls.
    src = {
        "input_ids": jnp.asarray(ids_list, jnp.int32).reshape(B, 1, S),
        "attention_mask": jnp.asarray(mask_list, jnp.int32).reshape(B, 1, S),
        "token_type_ids": jnp.zeros((B, 1, S), jnp.int32),
    }

    params = init_params(key, vocab_size)
    model = ApaclModelPallas(params)

    out = model(src)
    out = jax.block_until_ready(out)
    assert out.shape == (B, OUT_DIM) and out.dtype == F32
    assert bool(jnp.all(jnp.isfinite(out)))
    print("KERNEL_OK")
</pallas_src>

<mosaic_0001>
module attributes {stable_mosaic.version = 11 : i64} {
  func.func @kernel(%arg0: i32, %arg1: memref<8x512xf32, #tpu.memory_space<vmem>>, %arg2: memref<1x512xf32, #tpu.memory_space<vmem>>, %arg3: memref<1x512xf32, #tpu.memory_space<vmem>>, %arg4: memref<8x512xf32, #tpu.memory_space<vmem>>) attributes {dimension_semantics = [#tpu.dimension_semantics<parallel>], iteration_bounds = array<i64: 2>, scalar_prefetch = 0 : i64, scratch_operands = 0 : i64, tpu.core_type = #tpu.core_type<tc>, window_params = [{transform_indices = @transform_0, window_bounds = array<i64: 8, 512>}, {pipeline_mode = #tpu.pipeline_mode<synchronous>, transform_indices = @transform_1, window_bounds = array<i64: 1, 512>}, {pipeline_mode = #tpu.pipeline_mode<synchronous>, transform_indices = @transform_2, window_bounds = array<i64: 1, 512>}, {transform_indices = @transform_3, window_bounds = array<i64: 8, 512>}]} {
    %c0 = arith.constant 0 : index
    %c0_0 = arith.constant 0 : index
    %0 = vector.load %arg1[%c0, %c0_0] : memref<8x512xf32, #tpu.memory_space<vmem>>, vector<8x512xf32>
    %cst = arith.constant dense<0.000000e+00> : vector<8xf32>
    %1 = vector.multi_reduction <add>, %0, %cst [1] : vector<8x512xf32> to vector<8xf32>
    %2 = vector.shape_cast %1 : vector<8xf32> to vector<8x1xf32>
    %cst_1 = arith.constant 5.120000e+02 : f32
    %3 = vector.broadcast %cst_1 : f32 to vector<8x1xf32>
    %4 = arith.divf %2, %3 : vector<8x1xf32>
    %5 = vector.broadcast %4 : vector<8x1xf32> to vector<8x512xf32>
    %6 = arith.subf %0, %5 : vector<8x512xf32>
    %7 = arith.mulf %6, %6 : vector<8x512xf32>
    %cst_2 = arith.constant dense<0.000000e+00> : vector<8xf32>
    %8 = vector.multi_reduction <add>, %7, %cst_2 [1] : vector<8x512xf32> to vector<8xf32>
    %9 = vector.shape_cast %8 : vector<8xf32> to vector<8x1xf32>
    %cst_3 = arith.constant 5.120000e+02 : f32
    %10 = vector.broadcast %cst_3 : f32 to vector<8x1xf32>
    %11 = arith.divf %9, %10 : vector<8x1xf32>
    %12 = vector.broadcast %4 : vector<8x1xf32> to vector<8x512xf32>
    %13 = arith.subf %0, %12 : vector<8x512xf32>
    %cst_4 = arith.constant 9.99999996E-13 : f32
    %14 = vector.broadcast %cst_4 : f32 to vector<8x1xf32>
    %15 = arith.addf %11, %14 : vector<8x1xf32>
    %16 = math.rsqrt %15 : vector<8x1xf32>
    %17 = vector.broadcast %16 : vector<8x1xf32> to vector<8x512xf32>
    %18 = arith.mulf %13, %17 : vector<8x512xf32>
    %c0_5 = arith.constant 0 : index
    %c0_6 = arith.constant 0 : index
    %19 = vector.load %arg2[%c0_5, %c0_6] : memref<1x512xf32, #tpu.memory_space<vmem>>, vector<1x512xf32>
    %20 = vector.broadcast %19 : vector<1x512xf32> to vector<8x512xf32>
    %21 = arith.mulf %18, %20 : vector<8x512xf32>
    %c0_7 = arith.constant 0 : index
    %c0_8 = arith.constant 0 : index
    %22 = vector.load %arg3[%c0_7, %c0_8] : memref<1x512xf32, #tpu.memory_space<vmem>>, vector<1x512xf32>
    %23 = vector.broadcast %22 : vector<1x512xf32> to vector<8x512xf32>
    %24 = arith.addf %21, %23 : vector<8x512xf32>
    %c0_9 = arith.constant 0 : index
    %c0_10 = arith.constant 0 : index
    %25 = vector.load %arg4[%c0_9, %c0_10] : memref<8x512xf32, #tpu.memory_space<vmem>>, vector<8x512xf32>
    tpu.vector_store %arg4[%c0_9, %c0_10], %24 {strides = array<i32>} : memref<8x512xf32, #tpu.memory_space<vmem>>, vector<8x512xf32>,
    return
  }
  func.func @transform_0(%arg0: i32) -> (i32, i32) {
    %c0_i32 = arith.constant 0 : i32
    %c0_i32_0 = arith.constant 0 : i32
    return %arg0, %c0_i32 : i32, i32
  }
  func.func @transform_1(%arg0: i32) -> (i32, i32) {
    %c0_i32 = arith.constant 0 : i32
    %c0_i32_0 = arith.constant 0 : i32
    %c0_i32_1 = arith.constant 0 : i32
    return %c0_i32, %c0_i32_0 : i32, i32
  }
  func.func @transform_2(%arg0: i32) -> (i32, i32) {
    %c0_i32 = arith.constant 0 : i32
    %c0_i32_0 = arith.constant 0 : i32
    %c0_i32_1 = arith.constant 0 : i32
    return %c0_i32, %c0_i32_0 : i32, i32
  }
  func.func @transform_3(%arg0: i32) -> (i32, i32) {
    %c0_i32 = arith.constant 0 : i32
    %c0_i32_0 = arith.constant 0 : i32
    return %arg0, %c0_i32 : i32, i32
  }
}

</mosaic_0001>

<llo_original>
// kernel: tpu_custom_call.1
$region0: #{tpu_custom_call.1}
  #allocation0 [shape = 'u32[]', space=smem, size = 0x4, offset = 0x4, fixed_abs, tag = 'smem constant byte address 0x4 - core index']
  #allocation1 [shape = 'u32[144,128]{1,0:T(1,128)}', space=vmem, size = 0x12000, scoped, tag = 'internal scratch']
  %s0 = inlined_call_operand.hbm [shape: f32[16,512], index: 0, kind: input, shape index: {}]
  %s1 = inlined_call_operand.hbm [shape: f32[1,512], index: 1, kind: input, shape index: {}]
  %s2 = inlined_call_operand.vmem [shape: f32[1,512], index: 2, kind: input, shape index: {}]
  %s3 = inlined_call_operand.hbm [shape: f32[16,512], index: 3, kind: output, shape index: {}]
  %s4 = sld [smem:[#allocation0]]
  $region53: #{tpu_custom_call.1} parent=0
    _
  %s6 = ssub.s32 1, %s4
  %s7 = scalar_select 0, %s6, %s4
  $region1: #{tpu_custom_call.1} parent=0
    #allocation2 [shape = 'u8[32768]{0}', space=vmem, size = 0x8000, scoped, tag = 'input window, operand 0']
    #allocation3 [shape = 's32[2]{0}', space=sflag, size = 0x8, scoped, tag = 'scoped memory for tpu_custom_call.1']
    #allocation4 [shape = 's32[2]{0}', space=sflag, size = 0x8, scoped, tag = 'scoped memory for tpu_custom_call.1']
    #allocation5 [shape = 'u8[2048]{0}', space=vmem, size = 0x800, scoped, tag = 'input window, operand 1, single buffered']
    #allocation6 [shape = 's32[1]{0}', space=sflag, size = 0x4, scoped, tag = 'scoped memory for tpu_custom_call.1']
    #allocation7 [shape = 'u8[32768]{0}', space=vmem, size = 0x8000, scoped, tag = 'output window, operand 0']
    %8 = vsyncpa [#allocation3], 0
    %s9 = scalar_lea.sflag [#allocation3], 1
    %10 = vsyncpa %s9, 0
    %11 = vsyncpa [#allocation6], 0
    %12 = vsyncpa [#allocation4], 0
    %s13 = scalar_lea.sflag [#allocation4], 1
    %14 = vsyncpa %s13, 0
    loop: start=0, step=1, limit=4
    $region2: #{tpu_custom_call.1} parent=1 // loop_pre_header
      _
    $region3: #{tpu_custom_call.1} parent=1 // loop_header
      %s16 = sphi 0, %s20
      %p17 = scmp.ge.s32.totalorder %s16, 4
      %s26 = sphi 0, %s28
      %s29 = sphi 0, %s26
      %s30 = sphi 0, %s29
      %s46 = sphi 0, %s30
      %s50 = sphi 0, %s50
      %s52 = sphi 0, %s50
      %s53 = sphi 0, %s52
      %s67 = sphi 0, %s53
      %s71 = sphi 0, %s71
      %s73 = sphi 0, %s71
      %s74 = sphi 0, %s73
      %s88 = sphi 0, %s74
      %s94 = sphi 0, %s96
      %s97 = sphi 0, %s94
      %s98 = sphi 0, %s97
      %s114 = sphi 0, %s98
    $region4: #{tpu_custom_call.1} parent=1 // loop_header_branch
      %19 = sbr.rel (%p17) target = $region8
    $region5: #{tpu_custom_call.1} parent=1 // loop_body
      %s21 = ssub.s32 %s16, 1
      %s22 = ssub.s32 %s16, 2
      %s23 = sadd.s32 %s16, 1
      %s24 = ssub.s32 %s16, %s23
      %p25 = scmp.eq.s32.totalorder %s24, 0
      %s27 = sadd.s32 %s26, 1
      %s28 = scalar_select %p25, %s26, %s27
      %p31 = pneg %p25
      %p32 = scmp.eq.s32.totalorder %s16, 1
      %p33 = por %p31, %p32
      %p34 = scmp.ne.s32.totalorder %s26, %s29
      %p35 = scmp.eq.s32.totalorder %s16, 0
      %p36 = por %p34, %p35
      %p37 = scmp.ne.s32.totalorder %s26, %s29
      %p38 = scmp.eq.s32.totalorder %s21, 1
      %p39 = por %p37, %p38
      %p40 = scmp.ne.s32.totalorder %s29, %s30
      %p41 = scmp.eq.s32.totalorder %s21, 0
      %p42 = por %p40, %p41
      %p43 = scmp.ne.s32.totalorder %s29, %s30
      %p44 = scmp.eq.s32.totalorder %s22, 1
      %p45 = por %p43, %p44
      %p47 = scmp.ne.s32.totalorder %s30, %s46
      %p48 = scmp.eq.s32.totalorder %s22, 0
      %p49 = por %p47, %p48
      %s51 = sadd.s32 %s50, 1
      %p54 = scmp.eq.s32.totalorder %s16, 1
      %p55 = scmp.ne.s32.totalorder %s50, %s52
      %p56 = scmp.eq.s32.totalorder %s16, 0
      %p57 = por %p55, %p56
      %p58 = scmp.ne.s32.totalorder %s50, %s52
      %p59 = scmp.eq.s32.totalorder %s21, 1
      %p60 = por %p58, %p59
      %p61 = scmp.ne.s32.totalorder %s52, %s53
      %p62 = scmp.eq.s32.totalorder %s21, 0
      %p63 = por %p61, %p62
      %p64 = scmp.ne.s32.totalorder %s52, %s53
      %p65 = scmp.eq.s32.totalorder %s22, 1
      %p66 = por %p64, %p65
      %p68 = scmp.ne.s32.totalorder %s53, %s67
      %p69 = scmp.eq.s32.totalorder %s22, 0
      %p70 = por %p68, %p69
      %s72 = sadd.s32 %s71, 1
      %p75 = scmp.eq.s32.totalorder %s16, 1
      %p76 = scmp.ne.s32.totalorder %s71, %s73
      %p77 = scmp.eq.s32.totalorder %s16, 0
      %p78 = por %p76, %p77
      %p79 = scmp.ne.s32.totalorder %s71, %s73
      %p80 = scmp.eq.s32.totalorder %s21, 1
      %p81 = por %p79, %p80
      %p82 = scmp.ne.s32.totalorder %s73, %s74
      %p83 = scmp.eq.s32.totalorder %s21, 0
      %p84 = por %p82, %p83
      %p85 = scmp.ne.s32.totalorder %s73, %s74
      %p86 = scmp.eq.s32.totalorder %s22, 1
      %p87 = por %p85, %p86
      %p89 = scmp.ne.s32.totalorder %s74, %s88
      %p90 = scmp.eq.s32.totalorder %s22, 0
      %p91 = por %p89, %p90
      %s92 = ssub.s32 %s16, %s23
      %p93 = scmp.eq.s32.totalorder %s92, 0
      %s95 = sadd.s32 %s94, 1
      %s96 = scalar_select %p93, %s94, %s95
      %p99 = pneg %p93
      %p100 = scmp.eq.s32.totalorder %s16, 1
      %p101 = por %p99, %p100
      %p102 = scmp.ne.s32.totalorder %s94, %s97
      %p103 = scmp.eq.s32.totalorder %s16, 0
      %p104 = por %p102, %p103
      %p105 = scmp.ne.s32.totalorder %s94, %s97
      %p106 = scmp.eq.s32.totalorder %s21, 1
      %p107 = por %p105, %p106
      %p108 = scmp.ne.s32.totalorder %s97, %s98
      %p109 = scmp.eq.s32.totalorder %s21, 0
      %p110 = por %p108, %p109
      %p111 = scmp.ne.s32.totalorder %s97, %s98
      %p112 = scmp.eq.s32.totalorder %s22, 1
      %p113 = por %p111, %p112
      %p115 = scmp.ne.s32.totalorder %s98, %s114
      %p116 = scmp.eq.s32.totalorder %s22, 0
      %p117 = por %p115, %p116
      %p118 = scmp.le.s32.totalorder 1, %s16
      %p119 = scmp.lt.s32.totalorder %s16, 3
      %p120 = pnand %p118, %p119
      %p121 = pneg %p120
      // Predicated region
      $region9: #{tpu_custom_call.1} parent=5 // pred_check
        _
      $region10: #{tpu_custom_call.1} parent=5 // pred_check_branch
        %123 = sbr.rel (%p120) target = $region12
      $region11: #{tpu_custom_call.1} parent=5 // pred_region
        %s124 = ssub.s32 %s16, 1
        // Predicated region
        $region13: #{tpu_custom_call.1} parent=11 // pred_check
          %p125 = pneg %p63
        $region14: #{tpu_custom_call.1} parent=11 // pred_check_branch
          %127 = sbr.rel (%p125) target = $region16
        $region15: #{tpu_custom_call.1} parent=11 // pred_region
          %s129 = ssub.s32 64, 64
          %130 = vsyncadd [#allocation6], %s129
          %s132 = sshll.u32 [#allocation5], 4
          %s133 = int_to_ptr.vmem [resolvable:$true] %s132
          %135 = dma.hbm_to_vmem [thread:$0]  %s1, 64, %s133, [#allocation6]
        $region16: #{tpu_custom_call.1} parent=11 // pred_fallthru
          _
        // Predicated region
        $region17: #{tpu_custom_call.1} parent=11 // pred_check
          %p136 = pneg %p84
        $region18: #{tpu_custom_call.1} parent=11 // pred_check_branch
          %138 = sbr.rel (%p136) target = $region20
        $region19: #{tpu_custom_call.1} parent=11 // pred_region
          _
        $region20: #{tpu_custom_call.1} parent=11 // pred_fallthru
          _
      $region12: #{tpu_custom_call.1} parent=5 // pred_fallthru
        _
      %p139 = scmp.lt.s32.totalorder %s16, 2
      // Predicated region
      $region21: #{tpu_custom_call.1} parent=5 // pred_check
        %p140 = pneg %p139
      $region22: #{tpu_custom_call.1} parent=5 // pred_check_branch
        %142 = sbr.rel (%p140) target = $region24
      $region23: #{tpu_custom_call.1} parent=5 // pred_region
        // Predicated region
        $region25: #{tpu_custom_call.1} parent=23 // pred_check
          %p143 = pneg %p36
        $region26: #{tpu_custom_call.1} parent=23 // pred_check_branch
          %145 = sbr.rel (%p143) target = $region28
        $region27: #{tpu_custom_call.1} parent=23 // pred_region
          %s146 = sand.u32 %s26, 1
          %s147 = scalar_lea.sflag [#allocation3], %s146
          %s148 = sand.u32 %s26, 1
          %s149 = smul.addr %s148, 32
          %s150 = scalar_lea.vmem [#allocation2], %s149
          %s152 = ssub.s32 512, 512
          %153 = vsyncadd %s147, %s152
          %s154 = smul.addr %s16, 4
          %s155 = smul.addr %s154, 128
          %s156 = scalar_lea.hbm %s0, %s155
          %s158 = sshll.u32 %s150, 4
          %s159 = int_to_ptr.vmem [resolvable:$true] %s158
          %161 = dma.hbm_to_vmem [thread:$0]  %s156, 512, %s159, %s147
        $region28: #{tpu_custom_call.1} parent=23 // pred_fallthru
          _
      $region24: #{tpu_custom_call.1} parent=5 // pred_fallthru
        _
      %p162 = scmp.le.s32.totalorder 1, %s16
      %p163 = scmp.lt.s32.totalorder %s16, 3
      %p164 = pnand %p162, %p163
      %p165 = pneg %p164
      // Predicated region
      $region29: #{tpu_custom_call.1} parent=5 // pred_check
        _
      $region30: #{tpu_custom_call.1} parent=5 // pred_check_branch
        %167 = sbr.rel (%p164) target = $region32
      $region31: #{tpu_custom_call.1} parent=5 // pred_region
        %s168 = ssub.s32 %s16, 1
        %s169 = sand.u32 %s29, 1
        %s170 = scalar_lea.sflag [#allocation3], %s169
        %s171 = sand.u32 %s29, 1
        %s172 = smul.addr %s171, 32
        %s173 = scalar_lea.vmem [#allocation2], %s172
        // Predicated region
        $region33: #{tpu_custom_call.1} parent=31 // pred_check
          %p174 = pneg %p42
        $region34: #{tpu_custom_call.1} parent=31 // pred_check_branch
          %176 = sbr.rel (%p174) target = $region36
        $region35: #{tpu_custom_call.1} parent=31 // pred_region
          %177 = dma.done %s170, 512
        $region36: #{tpu_custom_call.1} parent=31 // pred_fallthru
          _
        // Predicated region
        $region37: #{tpu_custom_call.1} parent=31 // pred_check
          %p178 = pneg %p63
        $region38: #{tpu_custom_call.1} parent=31 // pred_check_branch
          %180 = sbr.rel (%p178) target = $region40
        $region39: #{tpu_custom_call.1} parent=31 // pred_region
          %181 = dma.done [#allocation6], 64
        $region40: #{tpu_custom_call.1} parent=31 // pred_fallthru
          _
        %s182 = sand.u32 %s29, 1
        %s183 = scalar_lea.sflag [#allocation3], %s182
        %s184 = sand.u32 %s29, 1
        %s185 = smul.addr %s184, 32
        %s186 = scalar_lea.vmem [#allocation2], %s185
        %p187 = pneg %p42
        %p188 = pneg %p39
        %p189 = pneg %p63
        %p190 = pneg %p60
        %p191 = pneg %p84
        %p192 = pneg %p81
        %p193 = pneg %p110
        %p194 = pneg %p107
        %s195 = sand.u32 %s97, 1
        %s196 = scalar_lea.sflag [#allocation4], %s195
        %s197 = sand.u32 %s97, 1
        %s198 = smul.addr %s197, 32
        %s199 = scalar_lea.vmem [#allocation7], %s198
        %v200 = vld [vmem:[%s173] sm:$0xff]
        %v201 = vld [vmem:[%s173 + $0x8] sm:$0xff]
        %v202 = vld [vmem:[%s173 + $0x10] sm:$0xff]
        %v203 = vld [vmem:[%s173 + $0x18] sm:$0xff]
        %v204 = vadd.f32 %v200, %v201
        %v205 = vadd.f32 %v204, %v202
        %v206 = vadd.f32 %v205, %v203
        %207 = vadd.xlane.f32.xlu0 %v206
        %v208 = vpop.xlane.xlu0 %207
        %v209 = vrcp.pop 512.0
        %v210 = vmul.f32 %v208, %v209
        %v211 = vsub.f32 %v200, %v210
        %v212 = vsub.f32 %v201, %v210
        %v213 = vsub.f32 %v202, %v210
        %v214 = vsub.f32 %v203, %v210
        %v215 = vmul.f32 %v211, %v211
        %v216 = vmul.f32 %v212, %v212
        %v217 = vmul.f32 %v213, %v213
        %v218 = vmul.f32 %v214, %v214
        %v219 = vadd.f32 %v215, %v216
        %v220 = vadd.f32 %v219, %v217
        %v221 = vadd.f32 %v220, %v218
        %222 = vadd.xlane.f32.xlu0 %v221
        %v223 = vpop.xlane.xlu0 %222
        %v224 = vmul.f32 %v223, %v209
        %v225 = vadd.f32 %v224, 1e-12
        %v226 = vrsqrt.pop %v225
        %v227 = vmul.f32 %v211, %v226
        %v228 = vmul.f32 %v212, %v226
        %v229 = vmul.f32 %v213, %v226
        %v230 = vmul.f32 %v214, %v226
        %v231 = vld [vmem:[#allocation5] sm:$0xf]
        %v233 = vlaneseq
        %v234 = vshrl.u32 %v233, 7
        %v235 = vsub.s32 0, %v234
        %v236 = vrot.slane %v231, %v235
        %v237 = vlaneseq
        %v238 = vshrl.u32 %v237, 7
        %v239 = vsub.s32 1, %v238
        %v240 = vrot.slane %v231, %v239
        %v241 = vlaneseq
        %v242 = vshrl.u32 %v241, 7
        %v243 = vsub.s32 2, %v242
        %v244 = vrot.slane %v231, %v243
        %v245 = vlaneseq
        %v246 = vshrl.u32 %v245, 7
        %v247 = vsub.s32 3, %v246
        %v248 = vrot.slane %v231, %v247
        %v253 = vmul.f32 %v227, %v236
        %v254 = vmul.f32 %v228, %v240
        %v255 = vmul.f32 %v229, %v244
        %v256 = vmul.f32 %v230, %v248
        %v257 = vld [vmem:[%s2] sm:$0xf]
        %v259 = vlaneseq
        %v260 = vshrl.u32 %v259, 7
        %v261 = vsub.s32 0, %v260
        %v262 = vrot.slane %v257, %v261
        %v263 = vlaneseq
        %v264 = vshrl.u32 %v263, 7
        %v265 = vsub.s32 1, %v264
        %v266 = vrot.slane %v257, %v265
        %v267 = vlaneseq
        %v268 = vshrl.u32 %v267, 7
        %v269 = vsub.s32 2, %v268
        %v270 = vrot.slane %v257, %v269
        %v271 = vlaneseq
        %v272 = vshrl.u32 %v271, 7
        %v273 = vsub.s32 3, %v272
        %v274 = vrot.slane %v257, %v273
        %v279 = vadd.f32 %v253, %v262
        %v280 = vadd.f32 %v254, %v266
        %v281 = vadd.f32 %v255, %v270
        %v282 = vadd.f32 %v256, %v274
        %283 = vst [vmem:[%s199] sm:$0xff] %v279
        %284 = vst [vmem:[%s199 + $0x8] sm:$0xff] %v280
        %285 = vst [vmem:[%s199 + $0x10] sm:$0xff] %v281
        %286 = vst [vmem:[%s199 + $0x18] sm:$0xff] %v282
        %s287 = sand.u32 %s97, 1
        %s288 = scalar_lea.sflag [#allocation4], %s287
        %s289 = sand.u32 %s97, 1
        %s290 = smul.addr %s289, 32
        %s291 = scalar_lea.vmem [#allocation7], %s290
        // Predicated region
        $region41: #{tpu_custom_call.1} parent=31 // pred_check
          %p292 = pneg %p107
        $region42: #{tpu_custom_call.1} parent=31 // pred_check_branch
          %294 = sbr.rel (%p292) target = $region44
        $region43: #{tpu_custom_call.1} parent=31 // pred_region
          %s296 = ssub.s32 512, 512
          %297 = vsyncadd %s288, %s296
          %s298 = smul.addr %s21, 4
          %s299 = smul.addr %s298, 128
          %s300 = scalar_lea.hbm %s3, %s299
          %s302 = sshll.u32 %s291, 4
          %s303 = int_to_ptr.vmem [resolvable:$true] %s302
          %305 = dma.vmem_to_hbm [thread:$0]  %s303, 512, %s300, %s288
        $region44: #{tpu_custom_call.1} parent=31 // pred_fallthru
          _
      $region32: #{tpu_custom_call.1} parent=5 // pred_fallthru
        _
      %p306 = scmp.le.s32.totalorder 2, %s16
      // Predicated region
      $region45: #{tpu_custom_call.1} parent=5 // pred_check
        %p307 = pneg %p306
      $region46: #{tpu_custom_call.1} parent=5 // pred_check_branch
        %309 = sbr.rel (%p307) target = $region48
      $region47: #{tpu_custom_call.1} parent=5 // pred_region
        %s310 = ssub.s32 %s16, 2
        // Predicated region
        $region49: #{tpu_custom_call.1} parent=47 // pred_check
          %p311 = pneg %p113
        $region50: #{tpu_custom_call.1} parent=47 // pred_check_branch
          %313 = sbr.rel (%p311) target = $region52
        $region51: #{tpu_custom_call.1} parent=47 // pred_region
          %s314 = sand.u32 %s98, 1
          %s315 = scalar_lea.sflag [#allocation4], %s314
          %s316 = sand.u32 %s98, 1
          %s317 = smul.addr %s316, 32
          %s318 = scalar_lea.vmem [#allocation7], %s317
          %319 = dma.done %s315, 512
        $region52: #{tpu_custom_call.1} parent=47 // pred_fallthru
          _
      $region48: #{tpu_custom_call.1} parent=5 // pred_fallthru
        _
    $region6: #{tpu_custom_call.1} parent=1 // loop_footer
      %s20 = sadd.s32 1, %s16
    $region7: #{tpu_custom_call.1} parent=1 // loop_footer_branch
      %15 = sbr.rel target = $region3
    $region8: #{tpu_custom_call.1} parent=1 // loop_exit
      _
    %320 = vsyncpa [#allocation3], 1
    %s321 = scalar_lea.sflag [#allocation3], 1
    %322 = vsyncpa %s321, 1
    %323 = vsyncpa [#allocation6], 1
    %324 = vsyncpa [#allocation4], 1
    %s325 = scalar_lea.sflag [#allocation4], 1
    %326 = vsyncpa %s325, 1

</llo_original>
